<compile_context>
chip_gen: v7x
topology: tpu7x:2x2x1
jax: 0.10.0
libtpu: 0.0.40
codegen_flags: <defaults>
</compile_context>

<pallas_src>
import functools

import jax
import jax.numpy as jnp
from jax.experimental import pallas as pl
from jax.experimental.pallas import tpu as pltpu


def _round_up(x, m):
    return ((x + m - 1) // m) * m


# --------------------------------------------------------------------------- #
# Kernel
# --------------------------------------------------------------------------- #
def _decoder_kernel(z_ref, w1_ref, b1_ref, w2_ref, b2_ref, out_ref):
    # Cast the activation tile to the weight dtype in-register (VPU work,
    # hidden under the memory-bound roofline); avoids a wrapper-side HBM pass.
    z = z_ref[...].astype(w1_ref.dtype)

    # fc1: [TB, Z] @ [Z, Hp] -> f32 accumulate, then + [1, Hp] bias.
    h = jnp.dot(z, w1_ref[...], preferred_element_type=jnp.float32) + b1_ref[...]

    # Softplus matching torch.nn.Softplus (beta=1, threshold=20):
    # linear for x > 20, log1p(exp(x)) otherwise (min() guards the untaken branch).
    h = jnp.where(h > 20.0, h, jnp.log1p(jnp.exp(jnp.minimum(h, 20.0))))

    # fc3: [TB, Hp] @ [Hp, O] -> f32 accumulate, then + [1, O] bias.
    y = jnp.dot(h.astype(w2_ref.dtype), w2_ref[...],
                preferred_element_type=jnp.float32) + b2_ref[...]

    # Sigmoid via tanh: single EUP push per element, exact.
    out_ref[...] = (0.5 * (jnp.tanh(0.5 * y) + 1.0)).astype(out_ref.dtype)


# --------------------------------------------------------------------------- #
# Sizing helpers (host-side, shape-only)
# --------------------------------------------------------------------------- #
def _vmem_budget_and_limit():
    """Generation-aware scoped-VMEM sizing.

    v5e/v6e (128 MiB VMEM) -> ~96 MiB budget, 100 MiB limit.
    v7x     (64 MiB VMEM)  -> ~47 MiB budget, ~51 MiB limit.
    """
    cap = 64 << 20
    try:
        info = pltpu.get_tpu_info()
        cap = int(getattr(info, "vmem_capacity_bytes", cap)) or cap
    except Exception:
        pass
    limit = min(int(cap * 0.8), 100 << 20)
    budget = max(limit - (4 << 20), 8 << 20)
    return budget, limit


def _pick_block_b(B, Z, Hp, O, w_bytes, out_bytes, budget):
    # Resident weights/biases (conservatively counted double-buffered).
    weight_bytes = 2 * ((Z * Hp + Hp * O) * w_bytes + (Hp + O) * 4)
    # Per batch-row VMEM: double-buffered z (f32 in HBM) + out tiles, plus
    # in-kernel intermediates: h f32 (4*Hp), h bf16 copy (2*Hp), y f32 (4*O).
    per_row = (2 * Z * 4) + (2 * O * out_bytes) + (6 * Hp + 4 * O)
    avail = max(budget - weight_bytes, 0)
    tb = avail // per_row if per_row > 0 else B
    # Sublane alignment for the output tile (bf16 packs 16 rows per vreg).
    row_align = 16 if out_bytes < 4 else 8
    if B > 32:
        # Keep >= ~4 grid steps: v7x megacore split + DMA/compute overlap.
        tb = min(tb, _round_up(-(-B // 4), row_align))
    if tb >= B:
        return int(B)  # single block equal to the full array dim (always legal)
    tb = max(row_align, (tb // row_align) * row_align)
    return int(tb)


# --------------------------------------------------------------------------- #
# Forward pass
# --------------------------------------------------------------------------- #
@functools.partial(jax.jit, static_argnames=("block_b", "out_dtype", "vmem_limit"))
def _decoder_forward_impl(z, w1p, b1p, w2p, b2p, *, block_b, out_dtype, vmem_limit):
    B, Z = z.shape
    Hp = w1p.shape[1]
    O = w2p.shape[1]
    w_bytes = jnp.dtype(w1p.dtype).itemsize
    out_bytes = jnp.dtype(out_dtype).itemsize

    grid = (pl.cdiv(B, block_b),)

    cost = pl.CostEstimate(
        flops=2 * B * (Z * Hp + Hp * O),
        transcendentals=B * (2 * Hp + O),
        bytes_accessed=(B * Z * jnp.dtype(z.dtype).itemsize
                        + (Z * Hp + Hp * O) * w_bytes + (Hp + O) * 4
                        + B * O * out_bytes),
    )

    # TODO(synk): for very large hidden/output dims (W2 no longer VMEM-resident)
    # add a second grid axis tiling the output-feature dim for W2/b2/out.
    return pl.pallas_call(
        _decoder_kernel,
        out_shape=jax.ShapeDtypeStruct((B, O), out_dtype),
        grid_spec=pltpu.PrefetchScalarGridSpec(
            num_scalar_prefetch=0,
            grid=grid,
            in_specs=[
                pl.BlockSpec((block_b, Z), lambda i: (i, 0)),   # z tile (streamed)
                pl.BlockSpec((Z, Hp), lambda i: (0, 0)),        # W1 (resident)
                pl.BlockSpec((1, Hp), lambda i: (0, 0)),        # b1 (resident)
                pl.BlockSpec((Hp, O), lambda i: (0, 0)),        # W2 (resident)
                pl.BlockSpec((1, O), lambda i: (0, 0)),         # b2 (resident)
            ],
            out_specs=pl.BlockSpec((block_b, O), lambda i: (i, 0)),
        ),
        compiler_params=pltpu.CompilerParams(
            dimension_semantics=("parallel",),   # v7x: split batch across 2 TCs
            vmem_limit_bytes=vmem_limit,
        ),
        cost_estimate=cost,
    )(z, w1p, b1p, w2p, b2p)


def decoder_forward(z, params, *, block_b=None, out_dtype=jnp.bfloat16):
    """z: [B, z_dim] float array; params from prepare_decoder_params()."""
    w1p, b1p, w2p, b2p = params
    B, Z = z.shape
    Hp = w1p.shape[1]
    O = w2p.shape[1]
    budget, vmem_limit = _vmem_budget_and_limit()
    if block_b is None:
        block_b = _pick_block_b(B, Z, Hp, O,
                                jnp.dtype(w1p.dtype).itemsize,
                                jnp.dtype(out_dtype).itemsize,
                                budget)
    return _decoder_forward_impl(z, w1p, b1p, w2p, b2p,
                                 block_b=int(block_b), out_dtype=out_dtype,
                                 vmem_limit=int(vmem_limit))


# --------------------------------------------------------------------------- #
# One-time parameter preparation (pad + cast OUTSIDE the per-call path)
# --------------------------------------------------------------------------- #
def prepare_decoder_params(w1, b1, w2, b2, *, param_dtype=jnp.bfloat16):
    """w1: [z_dim, H]; b1: [1, H] (or [H]); w2: [H, O]; b2: [1, O] (or [O]).

    Hidden dim is zero-padded to a multiple of 128 (exact: padded hidden
    columns multiply zero W2 rows). Weights stored in bf16 (f32 accumulation
    inside the kernel); biases kept in f32.
    """
    Z, H = w1.shape
    O = w2.shape[1]
    Hp = _round_up(H, 128)
    w1p = jnp.zeros((Z, Hp), param_dtype).at[:, :H].set(w1.astype(param_dtype))
    b1p = jnp.zeros((1, Hp), jnp.float32).at[:, :H].set(
        jnp.reshape(b1, (1, H)).astype(jnp.float32))
    w2p = jnp.zeros((Hp, O), param_dtype).at[:H, :].set(w2.astype(param_dtype))
    b2p = jnp.reshape(b2, (1, O)).astype(jnp.float32)
    return w1p, b1p, w2p, b2p


def init_decoder_params(key, z_dim, hidden_dim, output_dim):
    """Deterministic init mimicking PyTorch nn.Linear default (U[-1/sqrt(fan_in), +])."""
    k1, k2, k3, k4 = jax.random.split(key, 4)
    bound1 = 1.0 / jnp.sqrt(z_dim)
    bound2 = 1.0 / jnp.sqrt(hidden_dim)
    w1 = jax.random.uniform(k1, (z_dim, hidden_dim), jnp.float32, -bound1, bound1)
    b1 = jax.random.uniform(k2, (1, hidden_dim), jnp.float32, -bound1, bound1)
    w2 = jax.random.uniform(k3, (hidden_dim, output_dim), jnp.float32, -bound2, bound2)
    b2 = jax.random.uniform(k4, (1, output_dim), jnp.float32, -bound2, bound2)
    return w1, b1, w2, b2


def reference_forward(z, w1, b1, w2, b2):
    h = jax.nn.softplus(z @ w1 + b1)
    return jax.nn.sigmoid(h @ w2 + b2)


if __name__ == "__main__":
    # NOTE: at these toy sizes a plain jnp expression would match this kernel;
    # the tiling / residency structure is what makes it scale to large B.
    batch, z_dim, hidden_dim, output_dim = 8, 16, 32, 64

    key = jax.random.PRNGKey(0)
    k_z, k_p = jax.random.split(key)
    z = jax.random.normal(k_z, (batch, z_dim), jnp.float32)
    w1, b1, w2, b2 = init_decoder_params(k_p, z_dim, hidden_dim, output_dim)

    params = prepare_decoder_params(w1, b1, w2, b2)   # one-time pad + bf16 cast
    out = decoder_forward(z, params)
    out = jax.block_until_ready(out)

    ref = reference_forward(z, w1, b1, w2, b2)
    assert out.shape == (batch, output_dim)
    # bf16 matmul operands + bf16 output -> loosened tolerance vs f32 reference.
    assert jnp.allclose(out.astype(jnp.float32), ref, atol=2e-2, rtol=2e-2), \
        "mismatch vs reference"

    print("KERNEL_OK")
</pallas_src>

<mosaic_0001>
module attributes {stable_mosaic.version = 11 : i64} {
  func.func @_decoder_kernel(%arg0: i32, %arg1: memref<8x16xf32, #tpu.memory_space<vmem>>, %arg2: memref<16x128xbf16, #tpu.memory_space<vmem>>, %arg3: memref<1x128xf32, #tpu.memory_space<vmem>>, %arg4: memref<128x64xbf16, #tpu.memory_space<vmem>>, %arg5: memref<1x64xf32, #tpu.memory_space<vmem>>, %arg6: memref<8x64xbf16, #tpu.memory_space<vmem>>) attributes {dimension_semantics = [#tpu.dimension_semantics<parallel>], iteration_bounds = array<i64: 1>, scalar_prefetch = 0 : i64, scratch_operands = 0 : i64, tpu.core_type = #tpu.core_type<tc>, window_params = [{transform_indices = @transform_0, window_bounds = array<i64: 8, 16>}, {pipeline_mode = #tpu.pipeline_mode<synchronous>, transform_indices = @transform_1, window_bounds = array<i64: 16, 128>}, {pipeline_mode = #tpu.pipeline_mode<synchronous>, transform_indices = @transform_2, window_bounds = array<i64: 1, 128>}, {pipeline_mode = #tpu.pipeline_mode<synchronous>, transform_indices = @transform_3, window_bounds = array<i64: 128, 64>}, {pipeline_mode = #tpu.pipeline_mode<synchronous>, transform_indices = @transform_4, window_bounds = array<i64: 1, 64>}, {transform_indices = @transform_5, window_bounds = array<i64: 8, 64>}]} {
    %c0 = arith.constant 0 : index
    %c0_0 = arith.constant 0 : index
    %0 = vector.load %arg1[%c0, %c0_0] : memref<8x16xf32, #tpu.memory_space<vmem>>, vector<8x16xf32>
    %1 = arith.truncf %0 : vector<8x16xf32> to vector<8x16xbf16>
    %c0_1 = arith.constant 0 : index
    %c0_2 = arith.constant 0 : index
    %2 = vector.load %arg2[%c0_1, %c0_2] : memref<16x128xbf16, #tpu.memory_space<vmem>>, vector<16x128xbf16>
    %cst = arith.constant dense<0.000000e+00> : vector<8x128xf32>
    %3 = tpu.matmul %1, %2, %cst {dimension_numbers = #tpu.dot_dimension_numbers<[1], [0], [0], [1], [0, 0, 1, 1], [], []>} : vector<8x16xbf16>, vector<16x128xbf16>, vector<8x128xf32> -> vector<8x128xf32>
    %c0_3 = arith.constant 0 : index
    %c0_4 = arith.constant 0 : index
    %4 = vector.load %arg3[%c0_3, %c0_4] : memref<1x128xf32, #tpu.memory_space<vmem>>, vector<1x128xf32>
    %5 = vector.broadcast %4 : vector<1x128xf32> to vector<8x128xf32>
    %6 = arith.addf %3, %5 : vector<8x128xf32>
    %cst_5 = arith.constant 2.000000e+01 : f32
    %7 = vector.broadcast %cst_5 : f32 to vector<8x128xf32>
    %8 = arith.cmpf ogt, %6, %7 : vector<8x128xf32>
    %cst_6 = arith.constant 2.000000e+01 : f32
    %9 = vector.broadcast %cst_6 : f32 to vector<8x128xf32>
    %10 = arith.minimumf %6, %9 : vector<8x128xf32>
    %11 = math.exp %10 : vector<8x128xf32>
    %12 = math.log1p %11 : vector<8x128xf32>
    %13 = arith.select %8, %6, %12 : vector<8x128xi1>, vector<8x128xf32>
    %14 = arith.truncf %13 : vector<8x128xf32> to vector<8x128xbf16>
    %c0_7 = arith.constant 0 : index
    %c0_8 = arith.constant 0 : index
    %15 = vector.load %arg4[%c0_7, %c0_8] : memref<128x64xbf16, #tpu.memory_space<vmem>>, vector<128x64xbf16>
    %cst_9 = arith.constant dense<0.000000e+00> : vector<8x64xf32>
    %16 = tpu.matmul %14, %15, %cst_9 {dimension_numbers = #tpu.dot_dimension_numbers<[1], [0], [0], [1], [0, 0, 1, 1], [], []>} : vector<8x128xbf16>, vector<128x64xbf16>, vector<8x64xf32> -> vector<8x64xf32>
    %c0_10 = arith.constant 0 : index
    %c0_11 = arith.constant 0 : index
    %17 = vector.load %arg5[%c0_10, %c0_11] : memref<1x64xf32, #tpu.memory_space<vmem>>, vector<1x64xf32>
    %18 = vector.broadcast %17 : vector<1x64xf32> to vector<8x64xf32>
    %19 = arith.addf %16, %18 : vector<8x64xf32>
    %cst_12 = arith.constant 5.000000e-01 : f32
    %20 = vector.broadcast %cst_12 : f32 to vector<8x64xf32>
    %21 = arith.mulf %20, %19 : vector<8x64xf32>
    %22 = math.tanh %21 : vector<8x64xf32>
    %cst_13 = arith.constant 1.000000e+00 : f32
    %23 = vector.broadcast %cst_13 : f32 to vector<8x64xf32>
    %24 = arith.addf %22, %23 : vector<8x64xf32>
    %cst_14 = arith.constant 5.000000e-01 : f32
    %25 = vector.broadcast %cst_14 : f32 to vector<8x64xf32>
    %26 = arith.mulf %25, %24 : vector<8x64xf32>
    %27 = arith.truncf %26 : vector<8x64xf32> to vector<8x64xbf16>
    %c0_15 = arith.constant 0 : index
    %c0_16 = arith.constant 0 : index
    %28 = vector.load %arg6[%c0_15, %c0_16] : memref<8x64xbf16, #tpu.memory_space<vmem>>, vector<8x64xbf16>
    tpu.vector_store %arg6[%c0_15, %c0_16], %27 {strides = array<i32>} : memref<8x64xbf16, #tpu.memory_space<vmem>>, vector<8x64xbf16>,
    return
  }
  func.func @transform_0(%arg0: i32) -> (i32, i32) {
    %c0_i32 = arith.constant 0 : i32
    %c0_i32_0 = arith.constant 0 : i32
    return %arg0, %c0_i32 : i32, i32
  }
  func.func @transform_1(%arg0: i32) -> (i32, i32) {
    %c0_i32 = arith.constant 0 : i32
    %c0_i32_0 = arith.constant 0 : i32
    %c0_i32_1 = arith.constant 0 : i32
    return %c0_i32, %c0_i32_0 : i32, i32
  }
  func.func @transform_2(%arg0: i32) -> (i32, i32) {
    %c0_i32 = arith.constant 0 : i32
    %c0_i32_0 = arith.constant 0 : i32
    %c0_i32_1 = arith.constant 0 : i32
    return %c0_i32, %c0_i32_0 : i32, i32
  }
  func.func @transform_3(%arg0: i32) -> (i32, i32) {
    %c0_i32 = arith.constant 0 : i32
    %c0_i32_0 = arith.constant 0 : i32
    %c0_i32_1 = arith.constant 0 : i32
    return %c0_i32, %c0_i32_0 : i32, i32
  }
  func.func @transform_4(%arg0: i32) -> (i32, i32) {
    %c0_i32 = arith.constant 0 : i32
    %c0_i32_0 = arith.constant 0 : i32
    %c0_i32_1 = arith.constant 0 : i32
    return %c0_i32, %c0_i32_0 : i32, i32
  }
  func.func @transform_5(%arg0: i32) -> (i32, i32) {
    %c0_i32 = arith.constant 0 : i32
    %c0_i32_0 = arith.constant 0 : i32
    return %arg0, %c0_i32 : i32, i32
  }
}

</mosaic_0001>

<llo_original>
// kernel: _decoder_forward_impl.1
$region0: #{_decoder_forward_impl.1}
  #allocation0 [shape = 'u32[]', space=smem, size = 0x4, offset = 0x4, fixed_abs, tag = 'smem constant byte address 0x4 - core index']
  #allocation1 [shape = 'u32[144,128]{1,0:T(1,128)}', space=vmem, size = 0x12000, scoped, tag = 'internal scratch']
  %s0 = inlined_call_operand.vmem [shape: f32[8,16], index: 0, kind: input, shape index: {}]
  %s1 = inlined_call_operand.vmem [shape: bf16[16,128], index: 1, kind: input, shape index: {}]
  %s2 = inlined_call_operand.vmem [shape: f32[1,128], index: 2, kind: input, shape index: {}]
  %s3 = inlined_call_operand.vmem [shape: bf16[128,64], index: 3, kind: input, shape index: {}]
  %s4 = inlined_call_operand.vmem [shape: f32[1,64], index: 4, kind: input, shape index: {}]
  %s5 = inlined_call_operand.hbm [shape: bf16[8,64], index: 5, kind: output, shape index: {}]
  %s6 = sld [smem:[#allocation0]]
  $region30: #{_decoder_forward_impl.1} parent=0
    _
  %s8 = ssub.s32 1, %s6
  %s9 = scalar_select 0, %s8, %s6
  $region1: #{_decoder_forward_impl.1} parent=0
    #allocation2 [shape = 'u8[2048]{0}', space=vmem, size = 0x800, scoped, tag = 'output window, operand 0, single buffered']
    #allocation3 [shape = 's32[1]{0}', space=sflag, size = 0x4, scoped, tag = 'scoped memory for _decoder_forward_impl.1']
    %10 = vsyncpa [#allocation3], 0
    // Predicated region
    $region2: #{_decoder_forward_impl.1} parent=1 // pred_check
      _
    $region3: #{_decoder_forward_impl.1} parent=1 // pred_check_branch
      %12 = sbr.rel (0) target = $region5
    $region4: #{_decoder_forward_impl.1} parent=1 // pred_region
      _
    $region5: #{_decoder_forward_impl.1} parent=1 // pred_fallthru
      _
    // Predicated region
    $region6: #{_decoder_forward_impl.1} parent=1 // pred_check
      _
    $region7: #{_decoder_forward_impl.1} parent=1 // pred_check_branch
      %14 = sbr.rel (0) target = $region9
    $region8: #{_decoder_forward_impl.1} parent=1 // pred_region
      _
    $region9: #{_decoder_forward_impl.1} parent=1 // pred_fallthru
      _
    // Predicated region
    $region10: #{_decoder_forward_impl.1} parent=1 // pred_check
      _
    $region11: #{_decoder_forward_impl.1} parent=1 // pred_check_branch
      %16 = sbr.rel (0) target = $region13
    $region12: #{_decoder_forward_impl.1} parent=1 // pred_region
      _
    $region13: #{_decoder_forward_impl.1} parent=1 // pred_fallthru
      _
    // Predicated region
    $region14: #{_decoder_forward_impl.1} parent=1 // pred_check
      _
    $region15: #{_decoder_forward_impl.1} parent=1 // pred_check_branch
      %18 = sbr.rel (0) target = $region17
    $region16: #{_decoder_forward_impl.1} parent=1 // pred_region
      _
    $region17: #{_decoder_forward_impl.1} parent=1 // pred_fallthru
      _
    // Predicated region
    $region18: #{_decoder_forward_impl.1} parent=1 // pred_check
      _
    $region19: #{_decoder_forward_impl.1} parent=1 // pred_check_branch
      %20 = sbr.rel (0) target = $region21
    $region20: #{_decoder_forward_impl.1} parent=1 // pred_region
      _
    $region21: #{_decoder_forward_impl.1} parent=1 // pred_fallthru
      _
    %v22 = vld [vmem:[%s0] sm:$0xff]
    %v23 = vpack.c.bf16 %v22, %v22
    %v24 = vld [vmem:[%s1] sm:$0xf]
    %v25 = vld [vmem:[%s1 + $0x4] sm:$0xf]
    %v26 = vld [vmem:[%s2] sm:$0x1]
    %v28 = vlaneseq
    %v29 = vshrl.u32 %v28, 7
    %v30 = vsub.s32 0, %v29
    %v31 = vrot.slane %v26, %v30
    %v35 = vunpack.c.l.b16 %v24
    %v36 = vunpack.c.l.b16 %v25
    %v37 = vpack.c.b16 %v36, %v35
    %vm39 = vcmask 130048
    %v41 = vsel %vm39, %v23, 0
    %43 = vmatprep.subr.bf16.mxu0 0
    %44 = vmatpush1.bf16.msra.mxu0 %v37
    %45 = vmatprep.subr.bf16.mxu0 0
    %46 = vmatpush1.bf16.msra.mxu0 0
    %47 = vmatprep.subr.bf16.mxu0 0
    %48 = vmatpush1.bf16.msra.mxu0 0
    %49 = vmatprep.subr.bf16.mxu0 0
    %50 = vmatpush1.bf16.msra.mxu0 0
    %51 = vmatprep.subr.bf16.mxu0 0
    %52 = vmatpush1.bf16.msra.mxu0 0
    %53 = vmatprep.subr.bf16.mxu0 0
    %54 = vmatpush1.bf16.msra.mxu0 0
    %55 = vmatprep.subr.bf16.mxu0 0
    %56 = vmatpush1.bf16.msra.mxu0 0
    %57 = vmatprep.subr.bf16.mxu0 0
    %58 = vmatpush1.bf16.msra.mxu0 0
    %59 = vmatprep.subr.bf16.mxu0 0
    %60 = vmatpush1.bf16.msra.mxu0 0
    %61 = vmatprep.subr.bf16.mxu0 0
    %62 = vmatpush1.bf16.msra.mxu0 0
    %63 = vmatprep.subr.bf16.mxu0 0
    %64 = vmatpush1.bf16.msra.mxu0 0
    %65 = vmatprep.subr.bf16.mxu0 0
    %66 = vmatpush1.bf16.msra.mxu0 0
    %67 = vmatprep.subr.bf16.mxu0 0
    %68 = vmatpush1.bf16.msra.mxu0 0
    %69 = vmatprep.subr.bf16.mxu0 0
    %70 = vmatpush1.bf16.msra.mxu0 0
    %71 = vmatprep.subr.bf16.mxu0 0
    %72 = vmatpush1.bf16.msra.mxu0 0
    %73 = vmatprep.subr.bf16.mxu0 0
    %74 = vmatpush1.bf16.msra.mxu0 0
    %75 = vmatprep.mubr.bf16.mxu0 0
    %76 = vmatmul.mubr.bf16.gmra.mrb[0].mxu0 %v41
    %v77 = vpop.f32.mrb[0].mxu0
    %v78 = vadd.f32 %v31, %v77
    %v79 = vpop.f32.mrb[0].mxu0
    %v80 = vpop.f32.mrb[0].mxu0
    %v81 = vpop.f32.mrb[0].mxu0
    %82 = vdwg.mxu0
    %vm83 = vcmp.gt.f32.partialorder %v78, 20.0
    %v84 = vmin.f32 %v78, 20.0
    %v85 = vmul.f32 %v84, 1.442695
    %v86 = vpow.pop %v85
    %v87 = vadd.f32 %v86, 1.0
    %v88 = vlog2.pop %v87
    %v89 = vmul.f32 %v88, 0.6931472
    %v90 = vmul.f32 -0.5, %v86
    %v91 = vadd.f32 %v90, 1.0
    %v92 = vmul.f32 %v91, %v86
    %v93 = vand.u32 2147483647, %v86
    %vm94 = vcmp.lt.f32.partialorder %v93, 0.0004427343
    %v95 = vsel %vm94, %v92, %v89
    %v96 = vsel %vm83, %v78, %v95
    %v97 = vpack.c.bf16 %v96, %v96
    %v98 = vld [vmem:[%s3] sm:$0xf]
    %v99 = vld [vmem:[%s3 + $0x4] sm:$0xf]
    %v100 = vld [vmem:[%s3 + $0x8] sm:$0xf]
    %v101 = vld [vmem:[%s3 + $0xc] sm:$0xf]
    %v102 = vld [vmem:[%s3 + $0x10] sm:$0xf]
    %v103 = vld [vmem:[%s3 + $0x14] sm:$0xf]
    %v104 = vld [vmem:[%s3 + $0x18] sm:$0xf]
    %v105 = vld [vmem:[%s3 + $0x1c] sm:$0xf]
    %v106 = vld [vmem:[%s3 + $0x20] sm:$0xf]
    %v107 = vld [vmem:[%s3 + $0x24] sm:$0xf]
    %v108 = vld [vmem:[%s3 + $0x28] sm:$0xf]
    %v109 = vld [vmem:[%s3 + $0x2c] sm:$0xf]
    %v110 = vld [vmem:[%s3 + $0x30] sm:$0xf]
    %v111 = vld [vmem:[%s3 + $0x34] sm:$0xf]
    %v112 = vld [vmem:[%s3 + $0x38] sm:$0xf]
    %v113 = vld [vmem:[%s3 + $0x3c] sm:$0xf]
    %v114 = vld [vmem:[%s4] sm:$0x1]
    %v116 = vlaneseq
    %v117 = vshrl.u32 %v116, 7
    %v118 = vsub.s32 0, %v117
    %v119 = vrot.slane %v114, %v118
    %v137 = vunpack.c.l.b16 %v98
    %v138 = vunpack.c.l.b16 %v99
    %v139 = vunpack.c.l.b16 %v100
    %v140 = vunpack.c.l.b16 %v101
    %v141 = vunpack.c.l.b16 %v102
    %v142 = vunpack.c.l.b16 %v103
    %v143 = vunpack.c.l.b16 %v104
    %v144 = vunpack.c.l.b16 %v105
    %v145 = vunpack.c.l.b16 %v106
    %v146 = vunpack.c.l.b16 %v107
    %v147 = vunpack.c.l.b16 %v108
    %v148 = vunpack.c.l.b16 %v109
    %v149 = vunpack.c.l.b16 %v110
    %v150 = vunpack.c.l.b16 %v111
    %v151 = vunpack.c.l.b16 %v112
    %v152 = vunpack.c.l.b16 %v113
    %v153 = vpack.c.b16 %v138, %v137
    %v154 = vpack.c.b16 %v140, %v139
    %v155 = vpack.c.b16 %v142, %v141
    %v156 = vpack.c.b16 %v144, %v143
    %v157 = vpack.c.b16 %v146, %v145
    %v158 = vpack.c.b16 %v148, %v147
    %v159 = vpack.c.b16 %v150, %v149
    %v160 = vpack.c.b16 %v152, %v151
    %169 = vmatprep.subr.bf16.mxu0 0
    %170 = vmatpush1.bf16.msra.mxu0 %v153
    %171 = vmatprep.subr.bf16.mxu0 0
    %172 = vmatpush1.bf16.msra.mxu0 %v154
    %173 = vmatprep.subr.bf16.mxu0 0
    %174 = vmatpush1.bf16.msra.mxu0 %v155
    %175 = vmatprep.subr.bf16.mxu0 0
    %176 = vmatpush1.bf16.msra.mxu0 %v156
    %177 = vmatprep.subr.bf16.mxu0 0
    %178 = vmatpush1.bf16.msra.mxu0 %v157
    %179 = vmatprep.subr.bf16.mxu0 0
    %180 = vmatpush1.bf16.msra.mxu0 %v158
    %181 = vmatprep.subr.bf16.mxu0 0
    %182 = vmatpush1.bf16.msra.mxu0 %v159
    %183 = vmatprep.subr.bf16.mxu0 0
    %184 = vmatpush1.bf16.msra.mxu0 %v160
    %185 = vmatprep.subr.bf16.mxu0 0
    %186 = vmatpush1.bf16.msra.mxu0 0
    %187 = vmatprep.subr.bf16.mxu0 0
    %188 = vmatpush1.bf16.msra.mxu0 0
    %189 = vmatprep.subr.bf16.mxu0 0
    %190 = vmatpush1.bf16.msra.mxu0 0
    %191 = vmatprep.subr.bf16.mxu0 0
    %192 = vmatpush1.bf16.msra.mxu0 0
    %193 = vmatprep.subr.bf16.mxu0 0
    %194 = vmatpush1.bf16.msra.mxu0 0
    %195 = vmatprep.subr.bf16.mxu0 0
    %196 = vmatpush1.bf16.msra.mxu0 0
    %197 = vmatprep.subr.bf16.mxu0 0
    %198 = vmatpush1.bf16.msra.mxu0 0
    %199 = vmatprep.subr.bf16.mxu0 0
    %200 = vmatpush1.bf16.msra.mxu0 0
    %201 = vmatprep.mubr.bf16.mxu0 0
    %202 = vmatmul.mubr.bf16.gmra.mrb[0].mxu0 %v97
    %v203 = vpop.f32.mrb[0].mxu0
    %v204 = vadd.f32 %v119, %v203
    %v205 = vpop.f32.mrb[0].mxu0
    %v206 = vpop.f32.mrb[0].mxu0
    %v207 = vpop.f32.mrb[0].mxu0
    %208 = vdwg.mxu0
    %v209 = vmul.f32 %v204, 0.5
    %v210 = vtanh.pop %v209
    %v211 = vadd.f32 %v210, 1.0
    %v212 = vmul.f32 %v211, 0.5
    %v213 = vpack.c.bf16 %v212, %v212
    %vm214 = vcmask 519168
    %215 = vst.msk [vmem:[#allocation2] sm:$0xf] %vm214, %v213
    // Predicated region
    $region22: #{_decoder_forward_impl.1} parent=1 // pred_check
      _
    $region23: #{_decoder_forward_impl.1} parent=1 // pred_check_branch
      %217 = sbr.rel (0) target = $region25
    $region24: #{_decoder_forward_impl.1} parent=1 // pred_region
      %s219 = ssub.s32 64, 64
      %220 = vsyncadd [#allocation3], %s219
      %s222 = sshll.u32 [#allocation2], 4
      %s223 = int_to_ptr.vmem [resolvable:$true] %s222
      %225 = dma.vmem_to_hbm [thread:$0]  %s223, 64, %s5, [#allocation3]
    $region25: #{_decoder_forward_impl.1} parent=1 // pred_fallthru
      _
    // Predicated region
    $region26: #{_decoder_forward_impl.1} parent=1 // pred_check
      _
    $region27: #{_decoder_forward_impl.1} parent=1 // pred_check_branch
      %227 = sbr.rel (0) target = $region29
    $region28: #{_decoder_forward_impl.1} parent=1 // pred_region
      %228 = dma.done [#allocation3], 64
    $region29: #{_decoder_forward_impl.1} parent=1 // pred_fallthru
      _
    %229 = vsyncpa [#allocation3], 1

</llo_original>
